<compile_context>
chip_gen: v7x
topology: tpu7x:2x2x1
jax: 0.10.0
libtpu: 0.0.40
codegen_flags: <defaults>
</compile_context>

<pallas_src>
import jax
import jax.numpy as jnp
from jax.experimental import pallas as pl
from jax.experimental.pallas import tpu as pltpu

_LANE = 128
_DEFAULT_BLOCK_BYTES = 4 * 1024 * 1024   # default upper bound per grid-step block
_MAX_BLOCK_BYTES = 8 * 1024 * 1024       # 4x double-buffered in+out stays << v7x's 64 MiB VMEM
_MIN_BLOCK_BYTES = 256 * 1024            # ~>=85% of HBM roofline already at this block size
_TARGET_GRID_STEPS = 8                   # keep enough steps to hide DMA prologue/epilogue
_SMALL_INPUT_BYTES = 1 * 1024 * 1024     # below this, XLA's fused exp wins


def _exp_kernel(x_ref, o_ref):
    # EUP handles exp; whole (tile_rows, 128) tile at once.
    o_ref[...] = jnp.exp(x_ref[...])


def _round_up(v: int, m: int) -> int:
    return (v + m - 1) // m * m


def _exp_pallas_slab(slab: jax.Array, tile_rows: int, vmem_limit_bytes: int) -> jax.Array:
    rows, lane = slab.shape
    grid = (pl.cdiv(rows, tile_rows),)
    return pl.pallas_call(
        _exp_kernel,
        out_shape=jax.ShapeDtypeStruct(slab.shape, slab.dtype),
        grid_spec=pltpu.PrefetchScalarGridSpec(
            num_scalar_prefetch=0,
            grid=grid,
            in_specs=[pl.BlockSpec((tile_rows, lane), lambda i: (i, 0))],
            out_specs=pl.BlockSpec((tile_rows, lane), lambda i: (i, 0)),
        ),
        compiler_params=pltpu.CompilerParams(
            dimension_semantics=("parallel",),
            vmem_limit_bytes=vmem_limit_bytes,
        ),
        # NOTE: intentionally no input_output_aliases -- see header comment.
    )(slab)


def exp_pallas(
    x: jax.Array,
    *,
    block_bytes: int = _DEFAULT_BLOCK_BYTES,
    min_pallas_bytes: int = _SMALL_INPUT_BYTES,
) -> jax.Array:
    """Elementwise exp. Pallas streaming kernel on large, 128-divisible inputs;
    plain (already roofline-bound) jnp.exp otherwise."""
    orig_shape = x.shape
    n = x.size
    itemsize = jnp.dtype(x.dtype).itemsize

    if n == 0 or n * itemsize < min_pallas_bytes:
        # Tiny input: standalone pallas_call overhead dominates; XLA's fused exp wins.
        return jnp.exp(x)

    if n % _LANE != 0:
        # Ragged flat size: a single fused XLA exp is one HBM pass (read n + write n),
        # already at the streaming roofline; pad+kernel+slice would be ~3 passes.
        return jnp.exp(x)

    rows = n // _LANE
    slab = x.reshape(rows, _LANE)            # free reshape: contiguous row-major, lane-dense

    # dtype-aware sublane packing: f32 -> 8, bf16 -> 16, int8/fp8 -> 32
    sublane = max(8, 32 // itemsize)
    row_bytes = _LANE * itemsize

    block_bytes = min(max(block_bytes, _MIN_BLOCK_BYTES), _MAX_BLOCK_BYTES)
    max_tile_rows = max(sublane, block_bytes // row_bytes)
    min_tile_rows = max(sublane, _MIN_BLOCK_BYTES // row_bytes)

    # Aim for ~_TARGET_GRID_STEPS grid steps, clamped to [min, max] block size.
    tile_rows = pl.cdiv(rows, _TARGET_GRID_STEPS)
    tile_rows = min(max(tile_rows, min_tile_rows), max_tile_rows)
    tile_rows = _round_up(tile_rows, sublane)
    if tile_rows >= rows:
        # Single block covering the whole slab; block == full array dim satisfies
        # the (8,128) divisibility rule for any row count.
        tile_rows = rows
    # else: tile_rows is a multiple of `sublane`; the last block may be partial
    # (Pallas masks the out-of-bounds rows on store).

    tile_bytes = tile_rows * row_bytes
    # Double-buffered input + output blocks, plus headroom for compiler scratch.
    vmem_limit_bytes = max(16 << 20, 4 * tile_bytes + (4 << 20))

    out = _exp_pallas_slab(slab, tile_rows, vmem_limit_bytes)
    return out.reshape(orig_shape)


if __name__ == "__main__":
    key = jax.random.PRNGKey(0)
    k1, k2, k3 = jax.random.split(key, 3)

    # Primary test: the module's (2, 4, 16, 16) input, forced through the Pallas
    # kernel (default dispatch would take the small-input fast path).
    x = jax.random.normal(k1, (2, 4, 16, 16), dtype=jnp.float32)
    y = exp_pallas(x, min_pallas_bytes=0)
    jax.block_until_ready(y)
    assert y.shape == x.shape and y.dtype == x.dtype
    assert jnp.allclose(y, jnp.exp(x), rtol=1e-6, atol=1e-6)

    # Multi-step grid with a partial (masked) last row-block:
    # rows = 1200 -> tile_rows = 512 -> grid of 3 steps, last block 176 rows.
    x2 = jax.random.normal(k2, (2, 600, 128), dtype=jnp.float32)
    y2 = exp_pallas(x2, min_pallas_bytes=0)
    assert jnp.allclose(y2, jnp.exp(x2), rtol=1e-6, atol=1e-6)

    # Flat size not a multiple of 128 -> single-pass jnp.exp fallback.
    x3 = jax.random.normal(k3, (3, 7, 11), dtype=jnp.float32)
    y3 = exp_pallas(x3, min_pallas_bytes=0)
    assert jnp.allclose(y3, jnp.exp(x3), rtol=1e-6, atol=1e-6)

    # Default dispatch (small-input fast path) still matches.
    y_fast = exp_pallas(x)
    assert jnp.allclose(y_fast, jnp.exp(x), rtol=1e-6, atol=1e-6)

    jax.block_until_ready((y, y2, y3, y_fast))
    print("KERNEL_OK")
</pallas_src>

<mosaic_0001>
module attributes {stable_mosaic.version = 11 : i64} {
  func.func @_exp_kernel(%arg0: i32, %arg1: memref<16x128xf32, #tpu.memory_space<vmem>>, %arg2: memref<16x128xf32, #tpu.memory_space<vmem>>) attributes {dimension_semantics = [#tpu.dimension_semantics<parallel>], iteration_bounds = array<i64: 1>, scalar_prefetch = 0 : i64, scratch_operands = 0 : i64, tpu.core_type = #tpu.core_type<tc>, window_params = [{transform_indices = @transform_0, window_bounds = array<i64: 16, 128>}, {transform_indices = @transform_1, window_bounds = array<i64: 16, 128>}]} {
    %c0 = arith.constant 0 : index
    %c0_0 = arith.constant 0 : index
    %0 = vector.load %arg1[%c0, %c0_0] : memref<16x128xf32, #tpu.memory_space<vmem>>, vector<16x128xf32>
    %1 = math.exp %0 : vector<16x128xf32>
    %c0_1 = arith.constant 0 : index
    %c0_2 = arith.constant 0 : index
    %2 = vector.load %arg2[%c0_1, %c0_2] : memref<16x128xf32, #tpu.memory_space<vmem>>, vector<16x128xf32>
    tpu.vector_store %arg2[%c0_1, %c0_2], %1 {strides = array<i32>} : memref<16x128xf32, #tpu.memory_space<vmem>>, vector<16x128xf32>,
    return
  }
  func.func @transform_0(%arg0: i32) -> (i32, i32) {
    %c0_i32 = arith.constant 0 : i32
    %c0_i32_0 = arith.constant 0 : i32
    return %arg0, %c0_i32 : i32, i32
  }
  func.func @transform_1(%arg0: i32) -> (i32, i32) {
    %c0_i32 = arith.constant 0 : i32
    %c0_i32_0 = arith.constant 0 : i32
    return %arg0, %c0_i32 : i32, i32
  }
}

</mosaic_0001>

<llo_original>
// kernel: tpu_custom_call.1
$region0: #{tpu_custom_call.1}
  #allocation0 [shape = 'u32[]', space=smem, size = 0x4, offset = 0x4, fixed_abs, tag = 'smem constant byte address 0x4 - core index']
  #allocation1 [shape = 'u32[144,128]{1,0:T(1,128)}', space=vmem, size = 0x12000, scoped, tag = 'internal scratch']
  %s0 = inlined_call_operand.hbm [shape: f32[16,128], index: 0, kind: input, shape index: {}]
  %s1 = inlined_call_operand.hbm [shape: f32[16,128], index: 1, kind: output, shape index: {}]
  %s2 = sld [smem:[#allocation0]]
  $region18: #{tpu_custom_call.1} parent=0
    _
  %s4 = ssub.s32 1, %s2
  %s5 = scalar_select 0, %s4, %s2
  $region1: #{tpu_custom_call.1} parent=0
    #allocation2 [shape = 'u8[8192]{0}', space=vmem, size = 0x2000, scoped, tag = 'input window, operand 0, single buffered']
    #allocation3 [shape = 's32[1]{0}', space=sflag, size = 0x4, scoped, tag = 'scoped memory for tpu_custom_call.1']
    #allocation4 [shape = 's32[1]{0}', space=sflag, size = 0x4, scoped, tag = 'scoped memory for tpu_custom_call.1']
    #allocation5 [shape = 'u8[8192]{0}', space=vmem, size = 0x2000, scoped, tag = 'output window, operand 0, single buffered']
    %6 = vsyncpa [#allocation3], 0
    %7 = vsyncpa [#allocation4], 0
    // Predicated region
    $region2: #{tpu_custom_call.1} parent=1 // pred_check
      _
    $region3: #{tpu_custom_call.1} parent=1 // pred_check_branch
      %9 = sbr.rel (0) target = $region5
    $region4: #{tpu_custom_call.1} parent=1 // pred_region
      %s11 = ssub.s32 256, 256
      %12 = vsyncadd [#allocation3], %s11
      %s13 = sshll.u32 [#allocation2], 4
      %s14 = int_to_ptr.vmem [resolvable:$true] %s13
      %19 = dma.hbm_to_vmem [thread:$0]  %s0, 256, %s14, [#allocation3], 128, 128, 8
    $region5: #{tpu_custom_call.1} parent=1 // pred_fallthru
      _
    // Predicated region
    $region6: #{tpu_custom_call.1} parent=1 // pred_check
      _
    $region7: #{tpu_custom_call.1} parent=1 // pred_check_branch
      %21 = sbr.rel (0) target = $region9
    $region8: #{tpu_custom_call.1} parent=1 // pred_region
      %22 = dma.done [#allocation3], 256
    $region9: #{tpu_custom_call.1} parent=1 // pred_fallthru
      _
    %v23 = vld [vmem:[#allocation2] sm:$0xff]
    %v24 = vld [vmem:[#allocation2 + $0x8] sm:$0xff]
    %v25 = vmul.f32 %v23, 1.442695
    %v26 = vpow.pop %v25
    %v27 = vmul.f32 %v24, 1.442695
    %v28 = vpow.pop %v27
    %29 = vst [vmem:[#allocation5] sm:$0xff] %v26
    %30 = vst [vmem:[#allocation5 + $0x8] sm:$0xff] %v28
    // Predicated region
    $region10: #{tpu_custom_call.1} parent=1 // pred_check
      _
    $region11: #{tpu_custom_call.1} parent=1 // pred_check_branch
      %32 = sbr.rel (0) target = $region13
    $region12: #{tpu_custom_call.1} parent=1 // pred_region
      %s34 = ssub.s32 256, 256
      %35 = vsyncadd [#allocation4], %s34
      %s36 = sshll.u32 [#allocation5], 4
      %s37 = int_to_ptr.vmem [resolvable:$true] %s36
      %42 = dma.vmem_to_hbm [thread:$0]  %s37, 256, %s1, [#allocation4], 128, 128, 8
    $region13: #{tpu_custom_call.1} parent=1 // pred_fallthru
      _
    // Predicated region
    $region14: #{tpu_custom_call.1} parent=1 // pred_check
      _
    $region15: #{tpu_custom_call.1} parent=1 // pred_check_branch
      %44 = sbr.rel (0) target = $region17
    $region16: #{tpu_custom_call.1} parent=1 // pred_region
      %45 = dma.done [#allocation4], 256
    $region17: #{tpu_custom_call.1} parent=1 // pred_fallthru
      _
    %46 = vsyncpa [#allocation3], 1
    %47 = vsyncpa [#allocation4], 1

</llo_original>
